<compile_context>
chip_gen: v6e
topology: v6e:2x2x1
jax: 0.10.0
libtpu: 0.0.40
codegen_flags: <defaults>
</compile_context>

<pallas_src>
import math

import jax
import jax.numpy as jnp
import numpy as np
from jax.experimental import pallas as pl
from jax.experimental.pallas import tpu as pltpu


def _round_up(v, m):
    return ((v + m - 1) // m) * m


def _cdiv(a, b):
    return (a + b - 1) // b


def _fit_tile(dim, cap, align):
    """Largest multiple of `align` that is <= cap and divides `dim`.

    Precondition: dim % align == 0 (callers pad dims to `align` first), so the
    loop always terminates (worst case t == align).
    """
    cap = max(cap, align)
    t = (cap // align) * align
    while dim % t:
        t -= align
    return t


# ---------------------------------------------------------------------------
# Kernels
# ---------------------------------------------------------------------------
def _mm_kernel(a_ref, b_ref, o_ref):
    """Single k step: o = a @ b."""
    o_ref[...] = jnp.dot(a_ref[...], b_ref[...],
                         preferred_element_type=jnp.float32).astype(o_ref.dtype)


def _mm_bias_kernel(a_ref, b_ref, bias_ref, o_ref):
    """Single k step: o = a @ b + bias."""
    acc = jnp.dot(a_ref[...], b_ref[...], preferred_element_type=jnp.float32)
    o_ref[...] = (acc + bias_ref[...]).astype(o_ref.dtype)


def _mm_kernel_kacc(a_ref, b_ref, o_ref):
    """k reduction, f32 output: accumulate directly into the resident o tile."""
    prod = jnp.dot(a_ref[...], b_ref[...], preferred_element_type=jnp.float32)

    @pl.when(pl.program_id(2) == 0)
    def _():
        o_ref[...] = prod

    @pl.when(pl.program_id(2) != 0)
    def _():
        o_ref[...] += prod


def _mm_bias_kernel_kacc(a_ref, b_ref, bias_ref, o_ref):
    """k reduction, f32 output, bias fused into the last k step."""
    prod = jnp.dot(a_ref[...], b_ref[...], preferred_element_type=jnp.float32)
    k = pl.program_id(2)

    @pl.when(k == 0)
    def _():
        o_ref[...] = prod

    @pl.when(k != 0)
    def _():
        o_ref[...] += prod

    @pl.when(k == pl.num_programs(2) - 1)
    def _():
        o_ref[...] += bias_ref[...]


def _mm_kernel_scratch(a_ref, b_ref, o_ref, acc_ref):
    """k reduction, non-f32 output: f32 scratch accumulator (no zero-fill)."""
    prod = jnp.dot(a_ref[...], b_ref[...], preferred_element_type=jnp.float32)
    k = pl.program_id(2)

    @pl.when(k == 0)
    def _():
        acc_ref[...] = prod

    @pl.when(k != 0)
    def _():
        acc_ref[...] += prod

    @pl.when(k == pl.num_programs(2) - 1)
    def _():
        o_ref[...] = acc_ref[...].astype(o_ref.dtype)


def _mm_bias_kernel_scratch(a_ref, b_ref, bias_ref, o_ref, acc_ref):
    prod = jnp.dot(a_ref[...], b_ref[...], preferred_element_type=jnp.float32)
    k = pl.program_id(2)

    @pl.when(k == 0)
    def _():
        acc_ref[...] = prod

    @pl.when(k != 0)
    def _():
        acc_ref[...] += prod

    @pl.when(k == pl.num_programs(2) - 1)
    def _():
        o_ref[...] = (acc_ref[...] + bias_ref[...]).astype(o_ref.dtype)


# ---------------------------------------------------------------------------
# Tiled matmul wrapper
# ---------------------------------------------------------------------------
def _tiled_matmul(a, b, bias=None, *, out_dtype=jnp.float32,
                  max_tm=512, max_tk=1024, max_tn=256,
                  split_m_for_two_cores=True, trim=True):
    """(M, K) @ (K, N) [+ bias(N,)] with BlockSpec pipelining on the MXU.

    Operands are used in whatever dtype they arrive in (callers hoist casts);
    accumulation is always f32. With trim=False the padded, lane-dense
    (Mp, Np) slab is returned so it can feed the next matmul directly.
    """
    M, K = a.shape
    K2, N = b.shape
    assert K == K2, (a.shape, b.shape)
    assert max_tk >= 128 and max_tn >= 128

    sub = 16 if a.dtype == jnp.bfloat16 else 8

    # ---- M (rows of A / output): prefer multiples of 256 (v6e/v7x MXU) ----
    if M <= max_tm:
        Mp = _round_up(M, sub)
        tm = Mp
    else:
        align_m = 256 if max_tm >= 256 else sub
        Mp = _round_up(M, align_m)
        cap = max_tm
        if split_m_for_two_cores:
            # Keep >= 2 blocks on the parallel i axis so both v7x TensorCores
            # get work even when grid_j collapses to 1 (OUT_F <= max_tn).
            cap = min(cap, max(align_m, _round_up(_cdiv(Mp, 2), align_m)))
        tm = _fit_tile(Mp, cap, align_m)

    # ---- K (contraction) ----
    if K <= max_tk:
        Kp, tk = K, K                      # full-extent block, no padding
    else:
        Kp = _round_up(K, 128)
        tk = _fit_tile(Kp, max_tk, 128)

    # ---- N (output lanes): keep lane-dense (multiple of 128) ----
    Np = _round_up(N, 128)
    tn = Np if Np <= max_tn else _fit_tile(Np, max_tn, 128)

    # Zero-padding is mathematically exact for matmul; on the hoisted GCN
    # path the operands already arrive aligned so these are no-ops.
    a_p = a if a.shape == (Mp, Kp) else jnp.pad(a, ((0, Mp - M), (0, Kp - K)))
    b_p = b if b.shape == (Kp, Np) else jnp.pad(b, ((0, Kp - K), (0, Np - N)))

    operands = [a_p, b_p]
    grid_m, grid_n, grid_k = Mp // tm, Np // tn, Kp // tk

    if grid_k == 1:
        grid = (grid_m, grid_n)
        in_specs = [pl.BlockSpec((tm, tk), lambda i, j: (i, 0)),
                    pl.BlockSpec((tk, tn), lambda i, j: (0, j))]
        out_spec = pl.BlockSpec((tm, tn), lambda i, j: (i, j))
        bias_spec = pl.BlockSpec((1, tn), lambda i, j: (0, j))
        dims = ("parallel", "parallel")
        kernel = _mm_bias_kernel if bias is not None else _mm_kernel
        scratch = []
    else:
        grid = (grid_m, grid_n, grid_k)
        in_specs = [pl.BlockSpec((tm, tk), lambda i, j, k: (i, k)),
                    pl.BlockSpec((tk, tn), lambda i, j, k: (k, j))]
        out_spec = pl.BlockSpec((tm, tn), lambda i, j, k: (i, j))
        bias_spec = pl.BlockSpec((1, tn), lambda i, j, k: (0, j))
        dims = ("parallel", "parallel", "arbitrary")
        if np.dtype(out_dtype) == np.dtype(np.float32):
            # Accumulate directly into the resident output block (index_map
            # ignores k) — no scratch, no zero-fill, no final copy.
            kernel = _mm_bias_kernel_kacc if bias is not None else _mm_kernel_kacc
            scratch = []
        else:
            kernel = (_mm_bias_kernel_scratch if bias is not None
                      else _mm_kernel_scratch)
            scratch = [pltpu.VMEM((tm, tn), jnp.float32)]

    if bias is not None:
        bias2 = jnp.asarray(bias, jnp.float32).reshape(1, -1)
        if bias2.shape[1] != Np:
            bias2 = jnp.pad(bias2, ((0, 0), (0, Np - bias2.shape[1])))
        in_specs.append(bias_spec)
        operands.append(bias2)

    cost = pl.CostEstimate(
        flops=2 * Mp * Kp * Np,
        transcendentals=0,
        bytes_accessed=int(a_p.dtype.itemsize * Mp * Kp * grid_n
                           + b_p.dtype.itemsize * Kp * Np * grid_m
                           + np.dtype(out_dtype).itemsize * Mp * Np
                           + (4 * Np if bias is not None else 0)),
    )

    out = pl.pallas_call(
        kernel,
        out_shape=jax.ShapeDtypeStruct((Mp, Np), out_dtype),
        grid_spec=pltpu.PrefetchScalarGridSpec(
            num_scalar_prefetch=0,
            grid=grid,
            in_specs=in_specs,
            out_specs=out_spec,
            scratch_shapes=scratch,
        ),
        compiler_params=pltpu.CompilerParams(
            dimension_semantics=dims,
            # Max tiles (512x1024 + 1024x256 + 512x256, double-buffered) use
            # ~8 MiB; 48 MiB leaves headroom even on v7x's 64 MiB VMEM.
            vmem_limit_bytes=48 * 1024 * 1024,
        ),
        cost_estimate=cost,
    )(*operands)

    if trim and (Mp, Np) != (M, N):
        out = out[:M, :N]
    return out


# ---------------------------------------------------------------------------
# GraphConvolution forward
# ---------------------------------------------------------------------------
def prepare_adjacency(adj, compute_dtype=jnp.bfloat16):
    """Pad the (static) dense adjacency once to a 256-aligned square and cast.

    Call this ONCE and reuse the result across layers / epochs — it hoists the
    O(N^2) pad + cast HBM passes out of the per-forward path. compute_dtype
    = bf16 halves adjacency bytes (the adj @ support matmul is adj-stream
    bound) and uses the bf16-native MXU path; pass jnp.float32 for exactness.
    """
    n = adj.shape[0]
    assert adj.shape == (n, n)
    if compute_dtype is not None and adj.dtype != compute_dtype:
        adj = adj.astype(compute_dtype)
    n_pad = _round_up(n, 256)
    if n_pad != n:
        adj = jnp.pad(adj, ((0, n_pad - n), (0, n_pad - n)))
    return adj


def graph_convolution_forward(x, weight, bias, adj_prepared, *, num_nodes=None):
    """out = adj @ (x @ weight) [+ bias]  (GraphConvolution.forward).

    adj_prepared must come from prepare_adjacency(); its dtype selects the
    compute path (bf16 fast path by default, f32 exact if prepared as f32).
    Accumulation is always f32.
    """
    n = num_nodes if num_nodes is not None else x.shape[0]
    n_pad = adj_prepared.shape[0]
    out_f = weight.shape[1]

    # Pad node rows of x to match the padded adjacency (exact: zero rows).
    x_p = x if x.shape[0] == n_pad else jnp.pad(x, ((0, n_pad - x.shape[0]), (0, 0)))

    # Pad OUT_F to a multiple of 128 so support / output stay lane-dense
    # (unmasked vst); parameters are tiny so this pad is negligible.
    out_fp = _round_up(out_f, 128)
    w_p = weight if out_fp == out_f else jnp.pad(weight, ((0, 0), (0, out_fp - out_f)))
    b_p = None
    if bias is not None:
        b_p = bias if out_fp == out_f else jnp.pad(bias, (0, out_fp - out_f))

    # support = x @ W, emitted directly in the adjacency's compute dtype so
    # the second matmul streams half the bytes (no wrapper-side cast).
    support = _tiled_matmul(x_p, w_p, out_dtype=adj_prepared.dtype, trim=False)

    # output = adj @ support (+ bias); f32 accumulate and f32 output.
    out = _tiled_matmul(adj_prepared, support, bias=b_p,
                        out_dtype=jnp.float32, trim=False)

    # Single slice at the very end of the layer (multi-layer GCNs should keep
    # the padded lane-dense slab and slice only after the last layer).
    return out[:n, :out_f]


def graph_convolution_reference(x, weight, bias, adj):
    out = adj @ (x @ weight)
    if bias is not None:
        out = out + bias[None, :]
    return out


# ---------------------------------------------------------------------------
if __name__ == "__main__":
    N_NODES, IN_F, OUT_F = 100, 16, 32

    key = jax.random.PRNGKey(0)
    k_x, k_w, k_b, k_a, k_t1, k_t2, k_t3 = jax.random.split(key, 7)

    # Same init scheme as reset_parameters().
    stdv = 1.0 / math.sqrt(OUT_F)
    weight = jax.random.uniform(k_w, (IN_F, OUT_F), jnp.float32, -stdv, stdv)
    bias = jax.random.uniform(k_b, (OUT_F,), jnp.float32, -stdv, stdv)

    # Node features and a row-normalized adjacency with self-loops.
    x = jax.random.normal(k_x, (N_NODES, IN_F), jnp.float32)
    adj = (jax.random.uniform(k_a, (N_NODES, N_NODES)) < 0.1).astype(jnp.float32)
    adj = jnp.maximum(adj, jnp.eye(N_NODES, dtype=jnp.float32))
    adj = adj / adj.sum(axis=1, keepdims=True)

    ref = graph_convolution_reference(x, weight, bias, adj)
    ref_nb = graph_convolution_reference(x, weight, None, adj)

    # ---- f32-exact path (matches the torch reference tightly) ----
    adj_f32 = prepare_adjacency(adj, jnp.float32)
    out = jax.block_until_ready(
        graph_convolution_forward(x, weight, bias, adj_f32, num_nodes=N_NODES))
    np.testing.assert_allclose(np.asarray(out), np.asarray(ref),
                               rtol=1e-4, atol=1e-4)
    out_nb = jax.block_until_ready(
        graph_convolution_forward(x, weight, None, adj_f32, num_nodes=N_NODES))
    np.testing.assert_allclose(np.asarray(out_nb), np.asarray(ref_nb),
                               rtol=1e-4, atol=1e-4)

    # ---- default bf16 adjacency / bf16 support fast path ----
    adj_bf16 = prepare_adjacency(adj)                     # bf16 by default
    out_bf = jax.block_until_ready(
        graph_convolution_forward(x, weight, bias, adj_bf16, num_nodes=N_NODES))
    np.testing.assert_allclose(np.asarray(out_bf), np.asarray(ref),
                               rtol=2e-2, atol=2e-2)

    # ---- exercise the 3-D grid (k-reduction) kernels with forced tiles ----
    A = jax.random.normal(k_t1, (256, 384), jnp.float32)
    B = jax.random.normal(k_t2, (384, 128), jnp.float32)
    bv = jax.random.normal(k_t3, (128,), jnp.float32)

    mm = jax.block_until_ready(_tiled_matmul(
        A, B, bias=bv, out_dtype=jnp.float32,
        max_tm=128, max_tk=128, max_tn=128))              # accumulate-in-out path
    np.testing.assert_allclose(np.asarray(mm), np.asarray(A @ B + bv[None, :]),
                               rtol=1e-4, atol=1e-3)

    A16, B16 = A.astype(jnp.bfloat16), B.astype(jnp.bfloat16)
    mm_bf = jax.block_until_ready(_tiled_matmul(
        A16, B16, out_dtype=jnp.bfloat16,
        max_tm=128, max_tk=128, max_tn=128))              # f32-scratch path
    ref_bf = A16.astype(jnp.float32) @ B16.astype(jnp.float32)
    np.testing.assert_allclose(np.asarray(mm_bf).astype(np.float32),
                               np.asarray(ref_bf), rtol=3e-2, atol=0.5)

    print("KERNEL_OK")
</pallas_src>

<mosaic_0001>
module attributes {stable_mosaic.version = 11 : i64} {
  func.func @_mm_kernel(%arg0: i32, %arg1: i32, %arg2: memref<256x16xf32, #tpu.memory_space<vmem>>, %arg3: memref<16x128xf32, #tpu.memory_space<vmem>>, %arg4: memref<256x128xf32, #tpu.memory_space<vmem>>) attributes {dimension_semantics = [#tpu.dimension_semantics<parallel>, #tpu.dimension_semantics<parallel>], iteration_bounds = array<i64: 1, 1>, scalar_prefetch = 0 : i64, scratch_operands = 0 : i64, tpu.core_type = #tpu.core_type<tc>, window_params = [{transform_indices = @transform_0, window_bounds = array<i64: 256, 16>}, {transform_indices = @transform_1, window_bounds = array<i64: 16, 128>}, {transform_indices = @transform_2, window_bounds = array<i64: 256, 128>}]} {
    %c0 = arith.constant 0 : index
    %c0_0 = arith.constant 0 : index
    %0 = vector.load %arg2[%c0, %c0_0] : memref<256x16xf32, #tpu.memory_space<vmem>>, vector<256x16xf32>
    %c0_1 = arith.constant 0 : index
    %c0_2 = arith.constant 0 : index
    %1 = vector.load %arg3[%c0_1, %c0_2] : memref<16x128xf32, #tpu.memory_space<vmem>>, vector<16x128xf32>
    %cst = arith.constant dense<0.000000e+00> : vector<256x128xf32>
    %2 = tpu.matmul %0, %1, %cst {dimension_numbers = #tpu.dot_dimension_numbers<[1], [0], [0], [1], [0, 0, 1, 1], [], []>} : vector<256x16xf32>, vector<16x128xf32>, vector<256x128xf32> -> vector<256x128xf32>
    %c0_3 = arith.constant 0 : index
    %c0_4 = arith.constant 0 : index
    %3 = vector.load %arg4[%c0_3, %c0_4] : memref<256x128xf32, #tpu.memory_space<vmem>>, vector<256x128xf32>
    tpu.vector_store %arg4[%c0_3, %c0_4], %2 {strides = array<i32>} : memref<256x128xf32, #tpu.memory_space<vmem>>, vector<256x128xf32>,
    return
  }
  func.func @transform_0(%arg0: i32, %arg1: i32) -> (i32, i32) {
    %c0_i32 = arith.constant 0 : i32
    %c0_i32_0 = arith.constant 0 : i32
    return %arg0, %c0_i32 : i32, i32
  }
  func.func @transform_1(%arg0: i32, %arg1: i32) -> (i32, i32) {
    %c0_i32 = arith.constant 0 : i32
    %c0_i32_0 = arith.constant 0 : i32
    return %c0_i32, %arg1 : i32, i32
  }
  func.func @transform_2(%arg0: i32, %arg1: i32) -> (i32, i32) {
    %c0_i32 = arith.constant 0 : i32
    return %arg0, %arg1 : i32, i32
  }
}

</mosaic_0001>

<llo_original>
// kernel: tpu_custom_call.1
$region0: #{tpu_custom_call.1}
  #allocation0 [shape = 'u32[]', space=smem, size = 0x4, offset = 0x4, fixed_abs, tag = 'smem constant byte address 0x4 - core index']
  #allocation1 [shape = 'u32[144,128]{1,0:T(1,128)}', space=vmem, size = 0x12000, scoped, tag = 'internal scratch']
  %s0 = inlined_call_operand.vmem [shape: f32[256,16], index: 0, kind: input, shape index: {}]
  %s1 = inlined_call_operand.vmem [shape: f32[16,128], index: 1, kind: input, shape index: {}]
  %s2 = inlined_call_operand.hbm [shape: f32[256,128], index: 2, kind: output, shape index: {}]
  %s3 = sld [smem:[#allocation0]]
  $region18: #{tpu_custom_call.1} parent=0
    _
  %s5 = ssub.s32 1, %s3
  %s6 = scalar_select 0, %s5, %s3
  $region1: #{tpu_custom_call.1} parent=0
    #allocation2 [shape = 'u8[131072]{0}', space=vmem, size = 0x20000, scoped, tag = 'output window, operand 0, single buffered']
    #allocation3 [shape = 's32[1]{0}', space=sflag, size = 0x4, scoped, tag = 'scoped memory for tpu_custom_call.1']
    %7 = vsyncpa [#allocation3], 0
    // Predicated region
    $region2: #{tpu_custom_call.1} parent=1 // pred_check
      _
    $region3: #{tpu_custom_call.1} parent=1 // pred_check_branch
      %9 = sbr.rel (0) target = $region5
    $region4: #{tpu_custom_call.1} parent=1 // pred_region
      _
    $region5: #{tpu_custom_call.1} parent=1 // pred_fallthru
      _
    // Predicated region
    $region6: #{tpu_custom_call.1} parent=1 // pred_check
      _
    $region7: #{tpu_custom_call.1} parent=1 // pred_check_branch
      %11 = sbr.rel (0) target = $region9
    $region8: #{tpu_custom_call.1} parent=1 // pred_region
      _
    $region9: #{tpu_custom_call.1} parent=1 // pred_fallthru
      _
    %v12 = vld [vmem:[%s0] sm:$0xff]
    %v13 = vld [vmem:[%s0 + $0x8] sm:$0xff]
    %v14 = vld [vmem:[%s0 + $0x10] sm:$0xff]
    %v15 = vld [vmem:[%s0 + $0x18] sm:$0xff]
    %v16 = vld [vmem:[%s0 + $0x20] sm:$0xff]
    %v17 = vld [vmem:[%s0 + $0x28] sm:$0xff]
    %v18 = vld [vmem:[%s0 + $0x30] sm:$0xff]
    %v19 = vld [vmem:[%s0 + $0x38] sm:$0xff]
    %v20 = vld [vmem:[%s0 + $0x40] sm:$0xff]
    %v21 = vld [vmem:[%s0 + $0x48] sm:$0xff]
    %v22 = vld [vmem:[%s0 + $0x50] sm:$0xff]
    %v23 = vld [vmem:[%s0 + $0x58] sm:$0xff]
    %v24 = vld [vmem:[%s0 + $0x60] sm:$0xff]
    %v25 = vld [vmem:[%s0 + $0x68] sm:$0xff]
    %v26 = vld [vmem:[%s0 + $0x70] sm:$0xff]
    %v27 = vld [vmem:[%s0 + $0x78] sm:$0xff]
    %v28 = vld [vmem:[%s0 + $0x80] sm:$0xff]
    %v29 = vld [vmem:[%s0 + $0x88] sm:$0xff]
    %v30 = vld [vmem:[%s0 + $0x90] sm:$0xff]
    %v31 = vld [vmem:[%s0 + $0x98] sm:$0xff]
    %v32 = vld [vmem:[%s0 + $0xa0] sm:$0xff]
    %v33 = vld [vmem:[%s0 + $0xa8] sm:$0xff]
    %v34 = vld [vmem:[%s0 + $0xb0] sm:$0xff]
    %v35 = vld [vmem:[%s0 + $0xb8] sm:$0xff]
    %v36 = vld [vmem:[%s0 + $0xc0] sm:$0xff]
    %v37 = vld [vmem:[%s0 + $0xc8] sm:$0xff]
    %v38 = vld [vmem:[%s0 + $0xd0] sm:$0xff]
    %v39 = vld [vmem:[%s0 + $0xd8] sm:$0xff]
    %v40 = vld [vmem:[%s0 + $0xe0] sm:$0xff]
    %v41 = vld [vmem:[%s0 + $0xe8] sm:$0xff]
    %v42 = vld [vmem:[%s0 + $0xf0] sm:$0xff]
    %v43 = vld [vmem:[%s0 + $0xf8] sm:$0xff]
    %v44 = vld [vmem:[%s1] sm:$0xff]
    %v45 = vld [vmem:[%s1 + $0x8] sm:$0xff]
    %vm46 = vcmask 130048
    %v48 = vsel %vm46, %v12, 0
    %v51 = vsel %vm46, %v13, 0
    %v54 = vsel %vm46, %v14, 0
    %v57 = vsel %vm46, %v15, 0
    %v60 = vsel %vm46, %v16, 0
    %v63 = vsel %vm46, %v17, 0
    %v66 = vsel %vm46, %v18, 0
    %v69 = vsel %vm46, %v19, 0
    %v72 = vsel %vm46, %v20, 0
    %v75 = vsel %vm46, %v21, 0
    %v78 = vsel %vm46, %v22, 0
    %v81 = vsel %vm46, %v23, 0
    %v84 = vsel %vm46, %v24, 0
    %v87 = vsel %vm46, %v25, 0
    %v90 = vsel %vm46, %v26, 0
    %v93 = vsel %vm46, %v27, 0
    %v96 = vsel %vm46, %v28, 0
    %v99 = vsel %vm46, %v29, 0
    %v102 = vsel %vm46, %v30, 0
    %v105 = vsel %vm46, %v31, 0
    %v108 = vsel %vm46, %v32, 0
    %v111 = vsel %vm46, %v33, 0
    %v114 = vsel %vm46, %v34, 0
    %v117 = vsel %vm46, %v35, 0
    %v120 = vsel %vm46, %v36, 0
    %v123 = vsel %vm46, %v37, 0
    %v126 = vsel %vm46, %v38, 0
    %v129 = vsel %vm46, %v39, 0
    %v132 = vsel %vm46, %v40, 0
    %v135 = vsel %vm46, %v41, 0
    %v138 = vsel %vm46, %v42, 0
    %v141 = vsel %vm46, %v43, 0
    %143 = vmatprep.subr.mxu0 0.0
    %144 = vmatpush1.msra.mxu0 0.0
    %145 = vmatprep.subr.mxu0 0.0
    %146 = vmatpush1.msra.mxu0 0.0
    %147 = vmatprep.subr.mxu0 0.0
    %148 = vmatpush1.msra.mxu0 0.0
    %149 = vmatprep.subr.mxu0 0.0
    %150 = vmatpush1.msra.mxu0 0.0
    %151 = vmatprep.subr.mxu0 0.0
    %152 = vmatpush1.msra.mxu0 0.0
    %153 = vmatprep.subr.mxu0 0.0
    %154 = vmatpush1.msra.mxu0 0.0
    %155 = vmatprep.subr.mxu0 0.0
    %156 = vmatpush1.msra.mxu0 0.0
    %157 = vmatprep.subr.mxu0 0.0
    %158 = vmatpush1.msra.mxu0 0.0
    %159 = vmatprep.subr.mxu0 0.0
    %160 = vmatpush1.msra.mxu0 0.0
    %161 = vmatprep.subr.mxu0 0.0
    %162 = vmatpush1.msra.mxu0 0.0
    %163 = vmatprep.subr.mxu0 0.0
    %164 = vmatpush1.msra.mxu0 0.0
    %165 = vmatprep.subr.mxu0 0.0
    %166 = vmatpush1.msra.mxu0 0.0
    %167 = vmatprep.subr.mxu0 0.0
    %168 = vmatpush1.msra.mxu0 0.0
    %169 = vmatprep.subr.mxu0 0.0
    %170 = vmatpush1.msra.mxu0 0.0
    %171 = vmatprep.subr.mxu0 0.0
    %172 = vmatpush1.msra.mxu0 %v45
    %173 = vmatprep.subr.mxu0 0.0
    %174 = vmatpush1.msra.mxu0 %v44
    %175 = vmatprep.subr.mxu0 0.0
    %176 = vmatpush2.msra.mxu0 0.0
    %177 = vmatprep.subr.mxu0 0.0
    %178 = vmatpush2.msra.mxu0 0.0
    %179 = vmatprep.subr.mxu0 0.0
    %180 = vmatpush2.msra.mxu0 0.0
    %181 = vmatprep.subr.mxu0 0.0
    %182 = vmatpush2.msra.mxu0 0.0
    %183 = vmatprep.subr.mxu0 0.0
    %184 = vmatpush2.msra.mxu0 0.0
    %185 = vmatprep.subr.mxu0 0.0
    %186 = vmatpush2.msra.mxu0 0.0
    %187 = vmatprep.subr.mxu0 0.0
    %188 = vmatpush2.msra.mxu0 0.0
    %189 = vmatprep.subr.mxu0 0.0
    %190 = vmatpush2.msra.mxu0 0.0
    %191 = vmatprep.subr.mxu0 0.0
    %192 = vmatpush2.msra.mxu0 0.0
    %193 = vmatprep.subr.mxu0 0.0
    %194 = vmatpush2.msra.mxu0 0.0
    %195 = vmatprep.subr.mxu0 0.0
    %196 = vmatpush2.msra.mxu0 0.0
    %197 = vmatprep.subr.mxu0 0.0
    %198 = vmatpush2.msra.mxu0 0.0
    %199 = vmatprep.subr.mxu0 0.0
    %200 = vmatpush2.msra.mxu0 0.0
    %201 = vmatprep.subr.mxu0 0.0
    %202 = vmatpush2.msra.mxu0 0.0
    %203 = vmatprep.subr.mxu0 0.0
    %204 = vmatpush2.msra.mxu0 0.0
    %205 = vmatprep.subr.mxu0 0.0
    %206 = vmatpush2.msra.mxu0 0.0
    %207 = vmatprep.mubr.f32.mxu0 0.0
    %208 = vmatmul.mubr.f32.gmra.mxu0 %v48
    %v209 = vpop.f32.mrf.mxu0
    %v210 = vadd.f32 0.0, %v209
    %v211 = vpop.f32.mrf.mxu0
    %212 = vmatprep.mubr.f32.mxu0 0.0
    %213 = vmatmul.mubr.f32.gmra.mxu0 %v51
    %v214 = vpop.f32.mrf.mxu0
    %v215 = vadd.f32 0.0, %v214
    %v216 = vpop.f32.mrf.mxu0
    %217 = vmatprep.mubr.f32.mxu0 0.0
    %218 = vmatmul.mubr.f32.gmra.mxu0 %v54
    %v219 = vpop.f32.mrf.mxu0
    %v220 = vadd.f32 0.0, %v219
    %v221 = vpop.f32.mrf.mxu0
    %222 = vmatprep.mubr.f32.mxu0 0.0
    %223 = vmatmul.mubr.f32.gmra.mxu0 %v57
    %v224 = vpop.f32.mrf.mxu0
    %v225 = vadd.f32 0.0, %v224
    %v226 = vpop.f32.mrf.mxu0
    %227 = vmatprep.mubr.f32.mxu0 0.0
    %228 = vmatmul.mubr.f32.gmra.mxu0 %v60
    %v229 = vpop.f32.mrf.mxu0
    %v230 = vadd.f32 0.0, %v229
    %v231 = vpop.f32.mrf.mxu0
    %232 = vmatprep.mubr.f32.mxu0 0.0
    %233 = vmatmul.mubr.f32.gmra.mxu0 %v63
    %v234 = vpop.f32.mrf.mxu0
    %v235 = vadd.f32 0.0, %v234
    %v236 = vpop.f32.mrf.mxu0
    %237 = vmatprep.mubr.f32.mxu0 0.0
    %238 = vmatmul.mubr.f32.gmra.mxu0 %v66
    %v239 = vpop.f32.mrf.mxu0
    %v240 = vadd.f32 0.0, %v239
    %v241 = vpop.f32.mrf.mxu0
    %242 = vmatprep.mubr.f32.mxu0 0.0
    %243 = vmatmul.mubr.f32.gmra.mxu0 %v69
    %v244 = vpop.f32.mrf.mxu0
    %v245 = vadd.f32 0.0, %v244
    %v246 = vpop.f32.mrf.mxu0
    %247 = vmatprep.mubr.f32.mxu0 0.0
    %248 = vmatmul.mubr.f32.gmra.mxu0 %v72
    %v249 = vpop.f32.mrf.mxu0
    %v250 = vadd.f32 0.0, %v249
    %v251 = vpop.f32.mrf.mxu0
    %252 = vmatprep.mubr.f32.mxu0 0.0
    %253 = vmatmul.mubr.f32.gmra.mxu0 %v75
    %v254 = vpop.f32.mrf.mxu0
    %v255 = vadd.f32 0.0, %v254
    %v256 = vpop.f32.mrf.mxu0
    %257 = vmatprep.mubr.f32.mxu0 0.0
    %258 = vmatmul.mubr.f32.gmra.mxu0 %v78
    %v259 = vpop.f32.mrf.mxu0
    %v260 = vadd.f32 0.0, %v259
    %v261 = vpop.f32.mrf.mxu0
    %262 = vmatprep.mubr.f32.mxu0 0.0
    %263 = vmatmul.mubr.f32.gmra.mxu0 %v81
    %v264 = vpop.f32.mrf.mxu0
    %v265 = vadd.f32 0.0, %v264
    %v266 = vpop.f32.mrf.mxu0
    %267 = vmatprep.mubr.f32.mxu0 0.0
    %268 = vmatmul.mubr.f32.gmra.mxu0 %v84
    %v269 = vpop.f32.mrf.mxu0
    %v270 = vadd.f32 0.0, %v269
    %v271 = vpop.f32.mrf.mxu0
    %272 = vmatprep.mubr.f32.mxu0 0.0
    %273 = vmatmul.mubr.f32.gmra.mxu0 %v87
    %v274 = vpop.f32.mrf.mxu0
    %v275 = vadd.f32 0.0, %v274
    %v276 = vpop.f32.mrf.mxu0
    %277 = vmatprep.mubr.f32.mxu0 0.0
    %278 = vmatmul.mubr.f32.gmra.mxu0 %v90
    %v279 = vpop.f32.mrf.mxu0
    %v280 = vadd.f32 0.0, %v279
    %v281 = vpop.f32.mrf.mxu0
    %282 = vmatprep.mubr.f32.mxu0 0.0
    %283 = vmatmul.mubr.f32.gmra.mxu0 %v93
    %v284 = vpop.f32.mrf.mxu0
    %v285 = vadd.f32 0.0, %v284
    %v286 = vpop.f32.mrf.mxu0
    %287 = vmatprep.mubr.f32.mxu0 0.0
    %288 = vmatmul.mubr.f32.gmra.mxu0 %v96
    %v289 = vpop.f32.mrf.mxu0
    %v290 = vadd.f32 0.0, %v289
    %v291 = vpop.f32.mrf.mxu0
    %292 = vmatprep.mubr.f32.mxu0 0.0
    %293 = vmatmul.mubr.f32.gmra.mxu0 %v99
    %v294 = vpop.f32.mrf.mxu0
    %v295 = vadd.f32 0.0, %v294
    %v296 = vpop.f32.mrf.mxu0
    %297 = vmatprep.mubr.f32.mxu0 0.0
    %298 = vmatmul.mubr.f32.gmra.mxu0 %v102
    %v299 = vpop.f32.mrf.mxu0
    %v300 = vadd.f32 0.0, %v299
    %v301 = vpop.f32.mrf.mxu0
    %302 = vmatprep.mubr.f32.mxu0 0.0
    %303 = vmatmul.mubr.f32.gmra.mxu0 %v105
    %v304 = vpop.f32.mrf.mxu0
    %v305 = vadd.f32 0.0, %v304
    %v306 = vpop.f32.mrf.mxu0
    %307 = vmatprep.mubr.f32.mxu0 0.0
    %308 = vmatmul.mubr.f32.gmra.mxu0 %v108
    %v309 = vpop.f32.mrf.mxu0
    %v310 = vadd.f32 0.0, %v309
    %v311 = vpop.f32.mrf.mxu0
    %312 = vmatprep.mubr.f32.mxu0 0.0
    %313 = vmatmul.mubr.f32.gmra.mxu0 %v111
    %v314 = vpop.f32.mrf.mxu0
    %v315 = vadd.f32 0.0, %v314
    %v316 = vpop.f32.mrf.mxu0
    %317 = vmatprep.mubr.f32.mxu0 0.0
    %318 = vmatmul.mubr.f32.gmra.mxu0 %v114
    %v319 = vpop.f32.mrf.mxu0
    %v320 = vadd.f32 0.0, %v319
    %v321 = vpop.f32.mrf.mxu0
    %322 = vmatprep.mubr.f32.mxu0 0.0
    %323 = vmatmul.mubr.f32.gmra.mxu0 %v117
    %v324 = vpop.f32.mrf.mxu0
    %v325 = vadd.f32 0.0, %v324
    %v326 = vpop.f32.mrf.mxu0
    %327 = vmatprep.mubr.f32.mxu0 0.0
    %328 = vmatmul.mubr.f32.gmra.mxu0 %v120
    %v329 = vpop.f32.mrf.mxu0
    %v330 = vadd.f32 0.0, %v329
    %v331 = vpop.f32.mrf.mxu0
    %332 = vmatprep.mubr.f32.mxu0 0.0
    %333 = vmatmul.mubr.f32.gmra.mxu0 %v123
    %v334 = vpop.f32.mrf.mxu0
    %v335 = vadd.f32 0.0, %v334
    %v336 = vpop.f32.mrf.mxu0
    %337 = vmatprep.mubr.f32.mxu0 0.0
    %338 = vmatmul.mubr.f32.gmra.mxu0 %v126
    %v339 = vpop.f32.mrf.mxu0
    %v340 = vadd.f32 0.0, %v339
    %v341 = vpop.f32.mrf.mxu0
    %342 = vmatprep.mubr.f32.mxu0 0.0
    %343 = vmatmul.mubr.f32.gmra.mxu0 %v129
    %v344 = vpop.f32.mrf.mxu0
    %v345 = vadd.f32 0.0, %v344
    %v346 = vpop.f32.mrf.mxu0
    %347 = vmatprep.mubr.f32.mxu0 0.0
    %348 = vmatmul.mubr.f32.gmra.mxu0 %v132
    %v349 = vpop.f32.mrf.mxu0
    %v350 = vadd.f32 0.0, %v349
    %v351 = vpop.f32.mrf.mxu0
    %352 = vmatprep.mubr.f32.mxu0 0.0
    %353 = vmatmul.mubr.f32.gmra.mxu0 %v135
    %v354 = vpop.f32.mrf.mxu0
    %v355 = vadd.f32 0.0, %v354
    %v356 = vpop.f32.mrf.mxu0
    %357 = vmatprep.mubr.f32.mxu0 0.0
    %358 = vmatmul.mubr.f32.gmra.mxu0 %v138
    %v359 = vpop.f32.mrf.mxu0
    %v360 = vadd.f32 0.0, %v359
    %v361 = vpop.f32.mrf.mxu0
    %362 = vmatprep.mubr.f32.mxu0 0.0
    %363 = vmatmul.mubr.f32.gmra.mxu0 %v141
    %v364 = vpop.f32.mrf.mxu0
    %v365 = vadd.f32 0.0, %v364
    %v366 = vpop.f32.mrf.mxu0
    %367 = vdwg.mxu0
    %368 = vst [vmem:[#allocation2] sm:$0xff] %v210
    %369 = vst [vmem:[#allocation2 + $0x8] sm:$0xff] %v215
    %370 = vst [vmem:[#allocation2 + $0x10] sm:$0xff] %v220
    %371 = vst [vmem:[#allocation2 + $0x18] sm:$0xff] %v225
    %372 = vst [vmem:[#allocation2 + $0x20] sm:$0xff] %v230
    %373 = vst [vmem:[#allocation2 + $0x28] sm:$0xff] %v235
    %374 = vst [vmem:[#allocation2 + $0x30] sm:$0xff] %v240
    %375 = vst [vmem:[#allocation2 + $0x38] sm:$0xff] %v245
    %376 = vst [vmem:[#allocation2 + $0x40] sm:$0xff] %v250
    %377 = vst [vmem:[#allocation2 + $0x48] sm:$0xff] %v255
    %378 = vst [vmem:[#allocation2 + $0x50] sm:$0xff] %v260
    %379 = vst [vmem:[#allocation2 + $0x58] sm:$0xff] %v265
    %380 = vst [vmem:[#allocation2 + $0x60] sm:$0xff] %v270
    %381 = vst [vmem:[#allocation2 + $0x68] sm:$0xff] %v275
    %382 = vst [vmem:[#allocation2 + $0x70] sm:$0xff] %v280
    %383 = vst [vmem:[#allocation2 + $0x78] sm:$0xff] %v285
    %384 = vst [vmem:[#allocation2 + $0x80] sm:$0xff] %v290
    %385 = vst [vmem:[#allocation2 + $0x88] sm:$0xff] %v295
    %386 = vst [vmem:[#allocation2 + $0x90] sm:$0xff] %v300
    %387 = vst [vmem:[#allocation2 + $0x98] sm:$0xff] %v305
    %388 = vst [vmem:[#allocation2 + $0xa0] sm:$0xff] %v310
    %389 = vst [vmem:[#allocation2 + $0xa8] sm:$0xff] %v315
    %390 = vst [vmem:[#allocation2 + $0xb0] sm:$0xff] %v320
    %391 = vst [vmem:[#allocation2 + $0xb8] sm:$0xff] %v325
    %392 = vst [vmem:[#allocation2 + $0xc0] sm:$0xff] %v330
    %393 = vst [vmem:[#allocation2 + $0xc8] sm:$0xff] %v335
    %394 = vst [vmem:[#allocation2 + $0xd0] sm:$0xff] %v340
    %395 = vst [vmem:[#allocation2 + $0xd8] sm:$0xff] %v345
    %396 = vst [vmem:[#allocation2 + $0xe0] sm:$0xff] %v350
    %397 = vst [vmem:[#allocation2 + $0xe8] sm:$0xff] %v355
    %398 = vst [vmem:[#allocation2 + $0xf0] sm:$0xff] %v360
    %399 = vst [vmem:[#allocation2 + $0xf8] sm:$0xff] %v365
    // Predicated region
    $region10: #{tpu_custom_call.1} parent=1 // pred_check
      _
    $region11: #{tpu_custom_call.1} parent=1 // pred_check_branch
      %401 = sbr.rel (0) target = $region13
    $region12: #{tpu_custom_call.1} parent=1 // pred_region
      %s403 = ssub.s32 4096, 4096
      %404 = vsyncadd [#allocation3], %s403
      %s405 = sshll.u32 [#allocation2], 4
      %s406 = int_to_ptr.vmem [resolvable:$true] %s405
      %411 = dma.vmem_to_hbm [thread:$0]  %s406, 4096, %s2, [#allocation3], 128, 128, 8
    $region13: #{tpu_custom_call.1} parent=1 // pred_fallthru
      _
    // Predicated region
    $region14: #{tpu_custom_call.1} parent=1 // pred_check
      _
    $region15: #{tpu_custom_call.1} parent=1 // pred_check_branch
      %413 = sbr.rel (0) target = $region17
    $region16: #{tpu_custom_call.1} parent=1 // pred_region
      %414 = dma.done [#allocation3], 4096
    $region17: #{tpu_custom_call.1} parent=1 // pred_fallthru
      _
    %415 = vsyncpa [#allocation3], 1

</llo_original>
